<compile_context>
chip_gen: v5e
topology: v5e:2x2
jax: 0.10.0
libtpu: 0.0.40
codegen_flags: <defaults>
</compile_context>

<pallas_src>
import functools
import math

import jax
import jax.numpy as jnp
from jax.experimental import pallas as pl
from jax.experimental.pallas import tpu as pltpu


def _round_up(x, m):
    return (x + m - 1) // m * m


def _swiglu_kernel(beta_ref, x_ref, wv_ref, o_ref, *, lanes):
    """One packed row-tile of SwiGLU.

    beta_ref: (1,) float32 in SMEM
    x_ref   : (tm, lanes)      f32, `pack` logical rows per 128-lane row
    wv_ref  : (lanes, 2*lanes) bf16 fused [blockdiag(W^T) | blockdiag(V^T)]
    o_ref   : (tm, lanes)      f32
    """
    x = x_ref[...]
    # Single dense MXU pass for both projections (bf16 in, f32 accumulate).
    y = jnp.dot(x.astype(jnp.bfloat16), wv_ref[...],
                preferred_element_type=jnp.float32)
    wh = y[:, :lanes]          # split at a 128-lane tile boundary -> no relayout
    vh = y[:, lanes:]
    beta = beta_ref[0]
    swish = wh * jax.nn.sigmoid(beta * wh)   # sigmoid -> EUP slot, f32
    o_ref[...] = (swish * vh).astype(o_ref.dtype)


def prepare_swiglu_weights(w, v):
    """One-time (param-init) weight prep.

    w, v: (E, E) in torch nn.Linear layout (out_features, in_features).
    Returns the fused bf16 RHS of shape (pack*E, 2*pack*E) with
    pack = 128 // E (block-diagonal replication so 4 logical rows share one
    128-lane vreg row when E == 32).
    """
    e = w.shape[0]
    if e <= 128 and 128 % e == 0:
        pack = 128 // e
    elif e % 128 == 0:
        pack = 1
    else:
        # TODO(synk): sizes that neither divide nor are multiples of 128 need a
        # lane-padded fallback; not required for this module (size=32).
        raise NotImplementedError(f"unsupported feature size {e}")
    eye = jnp.eye(pack, dtype=jnp.float32)
    w_bd = jnp.kron(eye, w.T.astype(jnp.float32))   # (pack*e, pack*e)
    v_bd = jnp.kron(eye, v.T.astype(jnp.float32))
    return jnp.concatenate([w_bd, v_bd], axis=1).astype(jnp.bfloat16)


def swiglu(x, wv_packed, beta, *, row_tile=2048):
    """SwiGLU forward matching the PyTorch module.

    x        : (..., E) activations
    wv_packed: output of prepare_swiglu_weights(W, V)  (precomputed once)
    beta     : shape-(1,) scalar parameter
    row_tile : packed-row tile (each packed row = 128 lanes).  2048 -> ~1 MB
               f32 tiles; fits v5e/v6e/v7x default scoped VMEM double-buffered.
    """
    orig_shape = x.shape
    e = orig_shape[-1]
    lanes = wv_packed.shape[0]           # pack * e  (128 for E=32)
    pack = lanes // e
    n = math.prod(orig_shape[:-1]) if len(orig_shape) > 1 else 1
    xf = x.reshape(n, e).astype(jnp.float32)

    # Packed-row tiling.  tm is a multiple of 8 (sublane); n is padded (rows of
    # zeros) only when it is not already aligned to pack*tm.
    n_packed = -(-n // pack)
    tm = min(row_tile, _round_up(n_packed, 8))
    n_pad_packed = _round_up(n_packed, tm)
    n_pad = n_pad_packed * pack
    if n_pad != n:
        xf = jnp.pad(xf, ((0, n_pad - n), (0, 0)))
    x_packed = xf.reshape(n_pad_packed, lanes)       # contiguous -> free reshape

    beta_arr = jnp.asarray(beta, jnp.float32).reshape(1)
    grid = (n_pad_packed // tm,)

    cost = pl.CostEstimate(
        flops=2 * n_pad_packed * lanes * (2 * lanes) + 4 * n_pad_packed * lanes,
        transcendentals=n_pad_packed * lanes,
        bytes_accessed=(x_packed.size * 4 + wv_packed.size * 2
                        + n_pad_packed * lanes * 4),
    )

    kern = functools.partial(_swiglu_kernel, lanes=lanes)

    out_packed = pl.pallas_call(
        kern,
        out_shape=jax.ShapeDtypeStruct((n_pad_packed, lanes), jnp.float32),
        grid=grid,
        in_specs=[
            pl.BlockSpec(memory_space=pltpu.MemorySpace.SMEM),     # beta scalar
            pl.BlockSpec((tm, lanes), lambda i: (i, 0)),           # packed x tile
            pl.BlockSpec((lanes, 2 * lanes), lambda i: (0, 0)),    # fused weights
        ],
        out_specs=pl.BlockSpec((tm, lanes), lambda i: (i, 0)),
        compiler_params=pltpu.CompilerParams(
            dimension_semantics=("parallel",)),
        cost_estimate=cost,
    )(beta_arr, x_packed, wv_packed)

    out = out_packed.reshape(n_pad, e)
    if n_pad != n:
        out = out[:n]
    return out.reshape(orig_shape)


# ---------------- pure-JAX reference (mirrors PyTorch semantics) ----------------
def ref_swiglu(x, w, v, beta):
    wh = x @ w.T
    swish = wh * jax.nn.sigmoid(beta * wh)
    return swish * (x @ v.T)


if __name__ == "__main__":
    # SwiGLU(size=32) applied to a (batch, seq, size) activation.
    B, S, E = 2, 8, 32
    key = jax.random.PRNGKey(0)
    kx, kw, kv = jax.random.split(key, 3)
    x = jax.random.normal(kx, (B, S, E), jnp.float32)
    w = 0.05 * jax.random.normal(kw, (E, E), jnp.float32)
    v = 0.05 * jax.random.normal(kv, (E, E), jnp.float32)
    beta = jnp.array([1.3], jnp.float32)   # non-unit value to exercise the scalar path

    wv_packed = jax.block_until_ready(prepare_swiglu_weights(w, v))  # init-time

    out = jax.block_until_ready(swiglu(x, wv_packed, beta))
    ref = jax.block_until_ready(ref_swiglu(x, w, v, beta))

    assert out.shape == (B, S, E)
    err = float(jnp.max(jnp.abs(out - ref)))
    scale = float(jnp.max(jnp.abs(ref)))
    # bf16 MXU operands with f32 accumulation: tolerance loosened vs pure f32.
    assert err < 2e-2 * max(1.0, scale), err
    print("KERNEL_OK")
</pallas_src>

<mosaic_0001>
module attributes {stable_mosaic.version = 11 : i64} {
  func.func @_swiglu_kernel(%arg0: i32, %arg1: memref<1xf32, #tpu.memory_space<smem>>, %arg2: memref<8x128xf32, #tpu.memory_space<vmem>>, %arg3: memref<128x256xbf16, #tpu.memory_space<vmem>>, %arg4: memref<8x128xf32, #tpu.memory_space<vmem>>) attributes {dimension_semantics = [#tpu.dimension_semantics<parallel>], iteration_bounds = array<i64: 1>, scalar_prefetch = 0 : i64, scratch_operands = 0 : i64, tpu.core_type = #tpu.core_type<tc>, window_params = [{transform_indices = @transform_0, window_bounds = array<i64: 1>}, {transform_indices = @transform_1, window_bounds = array<i64: 8, 128>}, {pipeline_mode = #tpu.pipeline_mode<synchronous>, transform_indices = @transform_2, window_bounds = array<i64: 128, 256>}, {transform_indices = @transform_3, window_bounds = array<i64: 8, 128>}]} {
    %c0 = arith.constant 0 : index
    %c0_0 = arith.constant 0 : index
    %0 = vector.load %arg2[%c0, %c0_0] : memref<8x128xf32, #tpu.memory_space<vmem>>, vector<8x128xf32>
    %1 = arith.truncf %0 : vector<8x128xf32> to vector<8x128xbf16>
    %c0_1 = arith.constant 0 : index
    %c0_2 = arith.constant 0 : index
    %2 = vector.load %arg3[%c0_1, %c0_2] : memref<128x256xbf16, #tpu.memory_space<vmem>>, vector<128x256xbf16>
    %cst = arith.constant dense<0.000000e+00> : vector<8x256xf32>
    %3 = tpu.matmul %1, %2, %cst {dimension_numbers = #tpu.dot_dimension_numbers<[1], [0], [0], [1], [0, 0, 1, 1], [], []>} : vector<8x128xbf16>, vector<128x256xbf16>, vector<8x256xf32> -> vector<8x256xf32>
    %4 = vector.extract_strided_slice %3 {offsets = [0, 0], sizes = [8, 128], strides = [1, 1]} : vector<8x256xf32> to vector<8x128xf32>
    %5 = vector.extract_strided_slice %3 {offsets = [0, 128], sizes = [8, 128], strides = [1, 1]} : vector<8x256xf32> to vector<8x128xf32>
    %c0_3 = arith.constant 0 : index
    %6 = memref.load %arg1[%c0_3] : memref<1xf32, #tpu.memory_space<smem>>
    %7 = vector.broadcast %6 : f32 to vector<8x128xf32>
    %8 = arith.mulf %7, %4 : vector<8x128xf32>
    %9 = arith.negf %8 : vector<8x128xf32>
    %10 = math.exp %9 : vector<8x128xf32>
    %cst_4 = arith.constant 1.000000e+00 : f32
    %11 = vector.broadcast %cst_4 : f32 to vector<8x128xf32>
    %12 = arith.addf %11, %10 : vector<8x128xf32>
    %13 = arith.divf %11, %12 : vector<8x128xf32>
    %14 = arith.mulf %4, %13 : vector<8x128xf32>
    %15 = arith.mulf %14, %5 : vector<8x128xf32>
    %c0_5 = arith.constant 0 : index
    %c0_6 = arith.constant 0 : index
    %16 = vector.load %arg4[%c0_5, %c0_6] : memref<8x128xf32, #tpu.memory_space<vmem>>, vector<8x128xf32>
    tpu.vector_store %arg4[%c0_5, %c0_6], %15 {strides = array<i32>} : memref<8x128xf32, #tpu.memory_space<vmem>>, vector<8x128xf32>,
    return
  }
  func.func @transform_0(%arg0: i32) -> i32 {
    %c0_i32 = arith.constant 0 : i32
    %c0_i32_0 = arith.constant 0 : i32
    return %c0_i32 : i32
  }
  func.func @transform_1(%arg0: i32) -> (i32, i32) {
    %c0_i32 = arith.constant 0 : i32
    %c0_i32_0 = arith.constant 0 : i32
    return %arg0, %c0_i32 : i32, i32
  }
  func.func @transform_2(%arg0: i32) -> (i32, i32) {
    %c0_i32 = arith.constant 0 : i32
    %c0_i32_0 = arith.constant 0 : i32
    %c0_i32_1 = arith.constant 0 : i32
    return %c0_i32, %c0_i32_0 : i32, i32
  }
  func.func @transform_3(%arg0: i32) -> (i32, i32) {
    %c0_i32 = arith.constant 0 : i32
    %c0_i32_0 = arith.constant 0 : i32
    return %arg0, %c0_i32 : i32, i32
  }
}

</mosaic_0001>

<llo_original>
// kernel: tpu_custom_call.1
$region0: #{tpu_custom_call.1}
  #allocation0 [shape = 'u32[]', space=smem, size = 0x4, offset = 0x4, fixed_abs, tag = 'smem constant byte address 0x4 - core index']
  #allocation1 [shape = 'u32[72,128]{1,0:T(1,128)}', space=vmem, size = 0x9000, scoped, tag = 'internal scratch']
  #allocation2 [shape = 'f32[1]{0:T(128)S(6)}', space=smem, size = 0x200, scoped, tag = 'scoped memory for tpu_custom_call.1']
  %s0 = inlined_call_operand.<no memory space> [shape: f32[1], index: 0, kind: input, shape index: {}]
  %s1 = inlined_call_operand.hbm [shape: f32[8,128], index: 1, kind: input, shape index: {}]
  %s2 = inlined_call_operand.hbm [shape: bf16[128,256], index: 2, kind: input, shape index: {}]
  %s3 = inlined_call_operand.hbm [shape: f32[8,128], index: 3, kind: output, shape index: {}]
  %s4 = sld [smem:[#allocation0]]
  $region30: #{tpu_custom_call.1} parent=0
    _
  %s6 = ssub.s32 1, %s4
  %s7 = scalar_select 0, %s6, %s4
  %8 = sst [smem:[#allocation2]] %s0
  $region1: #{tpu_custom_call.1} parent=0
    #allocation3 [shape = 'u8[4096]{0}', space=vmem, size = 0x1000, scoped, tag = 'input window, operand 1, single buffered']
    #allocation4 [shape = 's32[1]{0}', space=sflag, size = 0x4, scoped, tag = 'scoped memory for tpu_custom_call.1']
    #allocation5 [shape = 's32[1]{0}', space=sflag, size = 0x4, scoped, tag = 'scoped memory for tpu_custom_call.1']
    #allocation6 [shape = 'u8[65536]{0}', space=vmem, size = 0x10000, scoped, tag = 'input window, operand 2, single buffered']
    #allocation7 [shape = 's32[1]{0}', space=sflag, size = 0x4, scoped, tag = 'scoped memory for tpu_custom_call.1']
    #allocation8 [shape = 'u8[4096]{0}', space=vmem, size = 0x1000, scoped, tag = 'output window, operand 0, single buffered']
    %9 = vsyncpa [#allocation4], 0
    %10 = vsyncpa [#allocation7], 0
    %11 = vsyncpa [#allocation5], 0
    // Predicated region
    $region2: #{tpu_custom_call.1} parent=1 // pred_check
      _
    $region3: #{tpu_custom_call.1} parent=1 // pred_check_branch
      %13 = sbr.rel (0) target = $region5
    $region4: #{tpu_custom_call.1} parent=1 // pred_region
      _
    $region5: #{tpu_custom_call.1} parent=1 // pred_fallthru
      _
    // Predicated region
    $region6: #{tpu_custom_call.1} parent=1 // pred_check
      _
    $region7: #{tpu_custom_call.1} parent=1 // pred_check_branch
      %15 = sbr.rel (0) target = $region9
    $region8: #{tpu_custom_call.1} parent=1 // pred_region
      %17 = vsyncadd [#allocation4], 0
      %s19 = sshll.u32 %s1, 4
      %s20 = int_to_ptr.hbm [resolvable:$true] %s19
      %s21 = sshll.u32 [#allocation3], 4
      %s22 = int_to_ptr.vmem [resolvable:$true] %s21
      %24 = dma.hbm_to_vmem [thread:$0]  %s20, 128, %s22, [#allocation4]
    $region9: #{tpu_custom_call.1} parent=1 // pred_fallthru
      _
    // Predicated region
    $region10: #{tpu_custom_call.1} parent=1 // pred_check
      _
    $region11: #{tpu_custom_call.1} parent=1 // pred_check_branch
      %26 = sbr.rel (0) target = $region13
    $region12: #{tpu_custom_call.1} parent=1 // pred_region
      %28 = vsyncadd [#allocation7], 0
      %s29 = sshll.u32 %s2, 4
      %s30 = int_to_ptr.hbm [resolvable:$true] %s29
      %s31 = sshll.u32 [#allocation6], 4
      %s32 = int_to_ptr.vmem [resolvable:$true] %s31
      %37 = dma.hbm_to_vmem [thread:$0]  %s30, 2048, %s32, [#allocation7], 128, 128, 8
    $region13: #{tpu_custom_call.1} parent=1 // pred_fallthru
      _
    // Predicated region
    $region14: #{tpu_custom_call.1} parent=1 // pred_check
      _
    $region15: #{tpu_custom_call.1} parent=1 // pred_check_branch
      %39 = sbr.rel (0) target = $region17
    $region16: #{tpu_custom_call.1} parent=1 // pred_region
      %41 = dma.done [#allocation4], 128
    $region17: #{tpu_custom_call.1} parent=1 // pred_fallthru
      _
    // Predicated region
    $region18: #{tpu_custom_call.1} parent=1 // pred_check
      _
    $region19: #{tpu_custom_call.1} parent=1 // pred_check_branch
      %43 = sbr.rel (0) target = $region21
    $region20: #{tpu_custom_call.1} parent=1 // pred_region
      %45 = dma.done [#allocation7], 2048
    $region21: #{tpu_custom_call.1} parent=1 // pred_fallthru
      _
    %v46 = vld [vmem:[#allocation3] sm:$0xff]
    %v47 = vpack.c.bf16 %v46, %v46
    %v48 = vld [vmem:[#allocation6] sm:$0xff]
    %v49 = vld [vmem:[#allocation6 + $0x8] sm:$0xff]
    %v50 = vld [vmem:[#allocation6 + $0x10] sm:$0xff]
    %v51 = vld [vmem:[#allocation6 + $0x18] sm:$0xff]
    %v52 = vld [vmem:[#allocation6 + $0x20] sm:$0xff]
    %v53 = vld [vmem:[#allocation6 + $0x28] sm:$0xff]
    %v54 = vld [vmem:[#allocation6 + $0x30] sm:$0xff]
    %v55 = vld [vmem:[#allocation6 + $0x38] sm:$0xff]
    %v56 = vld [vmem:[#allocation6 + $0x40] sm:$0xff]
    %v57 = vld [vmem:[#allocation6 + $0x48] sm:$0xff]
    %v58 = vld [vmem:[#allocation6 + $0x50] sm:$0xff]
    %v59 = vld [vmem:[#allocation6 + $0x58] sm:$0xff]
    %v60 = vld [vmem:[#allocation6 + $0x60] sm:$0xff]
    %v61 = vld [vmem:[#allocation6 + $0x68] sm:$0xff]
    %v62 = vld [vmem:[#allocation6 + $0x70] sm:$0xff]
    %v63 = vld [vmem:[#allocation6 + $0x78] sm:$0xff]
    %v80 = vunpack.c.l.b16 %v48
    %v81 = vunpack.c.h.b16 %v48
    %v82 = vunpack.c.l.b16 %v49
    %v83 = vunpack.c.h.b16 %v49
    %v84 = vunpack.c.l.b16 %v50
    %v85 = vunpack.c.h.b16 %v50
    %v86 = vunpack.c.l.b16 %v51
    %v87 = vunpack.c.h.b16 %v51
    %v88 = vunpack.c.l.b16 %v52
    %v89 = vunpack.c.h.b16 %v52
    %v90 = vunpack.c.l.b16 %v53
    %v91 = vunpack.c.h.b16 %v53
    %v92 = vunpack.c.l.b16 %v54
    %v93 = vunpack.c.h.b16 %v54
    %v94 = vunpack.c.l.b16 %v55
    %v95 = vunpack.c.h.b16 %v55
    %v96 = vunpack.c.l.b16 %v56
    %v97 = vunpack.c.h.b16 %v56
    %v98 = vunpack.c.l.b16 %v57
    %v99 = vunpack.c.h.b16 %v57
    %v100 = vunpack.c.l.b16 %v58
    %v101 = vunpack.c.h.b16 %v58
    %v102 = vunpack.c.l.b16 %v59
    %v103 = vunpack.c.h.b16 %v59
    %v104 = vunpack.c.l.b16 %v60
    %v105 = vunpack.c.h.b16 %v60
    %v106 = vunpack.c.l.b16 %v61
    %v107 = vunpack.c.h.b16 %v61
    %v108 = vunpack.c.l.b16 %v62
    %v109 = vunpack.c.h.b16 %v62
    %v110 = vunpack.c.l.b16 %v63
    %v111 = vunpack.c.h.b16 %v63
    %v112 = vpack.c.b16 %v82, %v80
    %v113 = vpack.c.b16 %v83, %v81
    %v114 = vpack.c.b16 %v86, %v84
    %v115 = vpack.c.b16 %v87, %v85
    %v116 = vpack.c.b16 %v90, %v88
    %v117 = vpack.c.b16 %v91, %v89
    %v118 = vpack.c.b16 %v94, %v92
    %v119 = vpack.c.b16 %v95, %v93
    %v120 = vpack.c.b16 %v98, %v96
    %v121 = vpack.c.b16 %v99, %v97
    %v122 = vpack.c.b16 %v102, %v100
    %v123 = vpack.c.b16 %v103, %v101
    %v124 = vpack.c.b16 %v106, %v104
    %v125 = vpack.c.b16 %v107, %v105
    %v126 = vpack.c.b16 %v110, %v108
    %v127 = vpack.c.b16 %v111, %v109
    %144 = vmatpush.bf16.msra.mxu0 %v126
    %145 = vmatpush.bf16.msra.mxu0 %v124
    %146 = vmatpush.bf16.msra.mxu0 %v122
    %147 = vmatpush.bf16.msra.mxu0 %v120
    %148 = vmatpush.bf16.msra.mxu0 %v118
    %149 = vmatpush.bf16.msra.mxu0 %v116
    %150 = vmatpush.bf16.msra.mxu0 %v114
    %151 = vmatpush.bf16.msra.mxu0 %v112
    %152 = vmatmul.bf16.gmra.mxu0 %v47
    %v153 = vpop.f32.mrf.mxu0
    %v154 = vadd.f32 0.0, %v153
    %v155 = vpop.f32.mrf.mxu0
    %156 = vdwg.mxu0
    %157 = vmatpush.bf16.msra.mxu0 %v127
    %158 = vmatpush.bf16.msra.mxu0 %v125
    %159 = vmatpush.bf16.msra.mxu0 %v123
    %160 = vmatpush.bf16.msra.mxu0 %v121
    %161 = vmatpush.bf16.msra.mxu0 %v119
    %162 = vmatpush.bf16.msra.mxu0 %v117
    %163 = vmatpush.bf16.msra.mxu0 %v115
    %164 = vmatpush.bf16.msra.mxu0 %v113
    %165 = vmatmul.bf16.gmra.mxu0 %v47
    %v166 = vpop.f32.mrf.mxu0
    %v167 = vadd.f32 0.0, %v166
    %v168 = vpop.f32.mrf.mxu0
    %169 = vdwg.mxu0
    %s170 = sld [smem:[#allocation2]]
    %v171 = vstv %s170
    %v172 = vmul.f32 %v171, %v154
    %v173 = vxor.u32 %v172, 2147483648
    %v174 = vmul.f32 %v173, 1.442695
    %v175 = vpow.pop %v174
    %v176 = vadd.f32 %v175, 1.0
    %v177 = vrcp.pop %v176
    %v178 = vmul.f32 %v176, %v177
    %v179 = vsub.f32 1.0, %v178
    %v180 = vmul.f32 %v177, %v179
    %v181 = vadd.f32 %v177, %v180
    %vm182 = vweird.f32 %v176
    %vm183 = vweird.f32 %v177
    %vm184 = vmor %vm182, %vm183
    %v185 = vsel %vm184, %v177, %v181
    %v186 = vand.u32 2147483647, %v176
    %vm187 = vcmp.eq.f32.partialorder %v186, 8.507059e+37
    %v188 = vand.u32 %v176, 2147483648
    %v189 = vor.u32 1.1754944e-38, %v188
    %v190 = vsel %vm187, %v189, %v185
    %v191 = vmul.f32 1.0, %v190
    %v192 = vmul.f32 %v154, %v191
    %v193 = vmul.f32 %v192, %v167
    %194 = vst [vmem:[#allocation8] sm:$0xff] %v193
    // Predicated region
    $region22: #{tpu_custom_call.1} parent=1 // pred_check
      _
    $region23: #{tpu_custom_call.1} parent=1 // pred_check_branch
      %196 = sbr.rel (0) target = $region25
    $region24: #{tpu_custom_call.1} parent=1 // pred_region
      %198 = vsyncadd [#allocation5], 0
      %s200 = sshll.u32 [#allocation8], 4
      %s201 = int_to_ptr.vmem [resolvable:$true] %s200
      %s202 = sshll.u32 %s3, 4
      %s203 = int_to_ptr.hbm [resolvable:$true] %s202
      %205 = dma.vmem_to_hbm [thread:$0]  %s201, 128, %s203, [#allocation5]
    $region25: #{tpu_custom_call.1} parent=1 // pred_fallthru
      _
    // Predicated region
    $region26: #{tpu_custom_call.1} parent=1 // pred_check
      _
    $region27: #{tpu_custom_call.1} parent=1 // pred_check_branch
      %207 = sbr.rel (0) target = $region29
    $region28: #{tpu_custom_call.1} parent=1 // pred_region
      %209 = dma.done [#allocation5], 128
    $region29: #{tpu_custom_call.1} parent=1 // pred_fallthru
      _
    %210 = vsyncpa [#allocation4], 1
    %211 = vsyncpa [#allocation7], 1
    %212 = vsyncpa [#allocation5], 1

</llo_original>
